<compile_context>
chip_gen: v6e
topology: v6e:2x2x1
jax: 0.10.0
libtpu: 0.0.40
codegen_flags: <defaults>
</compile_context>

<pallas_src>
import jax
import jax.numpy as jnp
import numpy as np
from jax.experimental import pallas as pl
from jax.experimental.pallas import tpu as pltpu

# ---- small, module-consistent shapes ----
B, S, H = 2, 8, 64          # batch, seq_len, hidden_size (768 in the real model)
HEADS, HS = 4, 16           # num_tags (heads), head_size
QW = HEADS * HS             # width of the q (and of the k) region after regroup
OUT = 2 * QW                # dense output dim (== 128 -> one full lane width)
BIG = 1e12
INV_SQRT = 1.0 / (HS ** 0.5)


# ----------------------------- Pallas kernel -----------------------------
def _global_pointer_kernel(x_ref, w_ref, b_ref, cs_ref, pad_ref, o_ref):
    # (1) Dense projection on the MXU: bf16 operands, f32 accumulation.
    proj = jnp.dot(x_ref[0], w_ref[...],
                   preferred_element_type=jnp.float32) + b_ref[...]     # (S, OUT)

    # (2) RoPE, lane-dense over the full projection.  Columns keep the original
    #     interleaved pair order, so the pair swap (-x[2i+1], x[2i]) is:
    #       even cols <- next col  (roll by OUT-1, i.e. shift -1)
    #       odd  cols <- prev col  (roll by +1)
    #     Sign + parity masks are folded into the two sin tables (wrapper), so
    #     this is 2 XLU rolls + 3 VPU FMAs, all in f32.
    rot_m = pltpu.roll(proj, OUT - 1, axis=1)      # proj[:, c+1] at column c
    rot_p = pltpu.roll(proj, 1, axis=1)            # proj[:, c-1] at column c
    roped = proj * cs_ref[0] + rot_m * cs_ref[1] + rot_p * cs_ref[2]    # (S, OUT)

    # (3) Head-batched bilinear scores: bf16 operands, f32 accumulation.
    #     Columns were regrouped head-major ([q_h0..q_hN | k_h0..k_hN]) in the
    #     wrapper, so q/k extraction is a contiguous split + contiguous HS-wide
    #     per-head slices.
    roped16 = roped.astype(jnp.bfloat16)
    q3 = jnp.stack([roped16[:, h * HS:(h + 1) * HS]
                    for h in range(HEADS)], axis=0)                     # (HEADS,S,HS)
    k3 = jnp.stack([roped16[:, QW + h * HS:QW + (h + 1) * HS]
                    for h in range(HEADS)], axis=0)                     # (HEADS,S,HS)
    lg = jnp.einsum('hmd,hnd->hmn', q3, k3,
                    preferred_element_type=jnp.float32)                 # (HEADS,S,S)

    # (4) Masking epilogue built in-kernel (only the (1,S) pad row is DMA'd):
    #     column pad mask + strictly-lower-triangular mask via 2-D iota.
    #     The 1/sqrt(head_size) scale is already folded into the q columns of W
    #     and into the additive constant.
    pad = pad_ref[0]                                                    # (1, S)
    row = jax.lax.broadcasted_iota(jnp.int32, (S, S), 0)
    col = jax.lax.broadcasted_iota(jnp.int32, (S, S), 1)
    tril = (row > col).astype(jnp.float32)                              # (S, S)
    negb = -(BIG * INV_SQRT) * ((1.0 - pad) + tril)                     # (S, S)
    o_ref[0] = lg * pad + negb


# ----------------------------- wrapper -----------------------------
def sinusoidal_cos_sin(seq_len, dim):
    """Matches GlobalPointer.sinusoidal_position_embedding + repeat_interleave."""
    pos = jnp.arange(seq_len, dtype=jnp.float32)[:, None]
    idx = jnp.arange(dim // 2, dtype=jnp.float32)
    theta = jnp.power(10000.0, -2.0 * idx / dim)
    emb = pos * theta                                  # (S, dim//2)
    cos_pos = jnp.repeat(jnp.cos(emb), 2, axis=-1)     # (S, dim)
    sin_pos = jnp.repeat(jnp.sin(emb), 2, axis=-1)     # (S, dim)
    return cos_pos, sin_pos


def global_pointer_pallas(x, W, bias, attn_mask):
    """GlobalPointer head: dense -> RoPE -> per-head bilinear scores -> masks."""
    # Head-major column permutation [q_h0..q_hN | k_h0..k_hN]; the interleaved
    # RoPE pair order inside each HS block is kept (the rotation is done with
    # rolls in the kernel, NOT by widening W).
    idx_q = (np.arange(HEADS)[:, None] * 2 * HS
             + np.arange(HS)[None, :]).reshape(-1)                      # q columns
    perm = np.concatenate([idx_q, idx_q + HS])                          # then k columns

    # Fold 1/sqrt(head_size) into the q columns of the dense layer.
    col_scale = np.concatenate([np.full(QW, INV_SQRT, np.float32),
                                np.ones(QW, np.float32)])
    w_p = (W[:, perm] * col_scale[None, :]).astype(jnp.bfloat16)        # (H, OUT)
    b_p = (bias[perm] * col_scale).reshape(1, OUT).astype(jnp.float32)  # (1, OUT)

    # RoPE tables: cos plus two parity/sign-masked sin tables so the in-kernel
    # rotation is two rolls + FMAs (no selects, no extra weight columns).
    cos_hs, sin_hs = sinusoidal_cos_sin(S, HS)                          # (S, HS)
    cos_full = jnp.tile(cos_hs, (1, 2 * HEADS))                         # (S, OUT)
    sin_full = jnp.tile(sin_hs, (1, 2 * HEADS))                         # (S, OUT)
    even = (jnp.arange(OUT) % 2 == 0)[None, :]
    sin_even = jnp.where(even, -sin_full, 0.0)      # contributes at even columns
    sin_odd = jnp.where(even, 0.0, sin_full)        # contributes at odd columns
    cs = jnp.stack([cos_full, sin_even, sin_odd], axis=0).astype(jnp.float32)

    # Only the pad row goes to the kernel; masks are built in-kernel.
    pad = attn_mask.astype(jnp.float32).reshape(B, 1, S)

    inv = pl.Buffered(1)   # grid-invariant operands: single-buffer (saves VMEM)
    grid_spec = pltpu.PrefetchScalarGridSpec(
        num_scalar_prefetch=0,
        grid=(B,),
        in_specs=[
            pl.BlockSpec((1, S, H), lambda b: (b, 0, 0)),                       # x (bf16)
            pl.BlockSpec((H, OUT), lambda b: (0, 0), pipeline_mode=inv),        # W (bf16)
            pl.BlockSpec((1, OUT), lambda b: (0, 0), pipeline_mode=inv),        # bias
            pl.BlockSpec((3, S, OUT), lambda b: (0, 0, 0), pipeline_mode=inv),  # cos/sin
            pl.BlockSpec((1, 1, S), lambda b: (b, 0, 0)),                       # pad row
        ],
        out_specs=pl.BlockSpec((1, HEADS, S, S), lambda b: (b, 0, 0, 0)),
    )
    return pl.pallas_call(
        _global_pointer_kernel,
        out_shape=jax.ShapeDtypeStruct((B, HEADS, S, S), jnp.float32),
        grid_spec=grid_spec,
        compiler_params=pltpu.CompilerParams(
            dimension_semantics=("parallel",)),
    )(x.astype(jnp.bfloat16), w_p, b_p, cs, pad)


# ----------------------------- JAX glue -----------------------------
def multilabel_categorical_crossentropy(y_pred, y_true):
    """Plain-JAX port of the reference loss (labels branch of forward)."""
    b, h = y_pred.shape[0], y_pred.shape[1]
    y_true = y_true.reshape(b * h, -1).astype(jnp.float32)
    y_pred = y_pred.reshape(b * h, -1)
    y_pred = (1.0 - 2.0 * y_true) * y_pred
    y_pred_neg = y_pred - y_true * BIG
    y_pred_pos = y_pred - (1.0 - y_true) * BIG
    zeros = jnp.zeros_like(y_pred[..., :1])
    y_pred_neg = jnp.concatenate([y_pred_neg, zeros], axis=-1)
    y_pred_pos = jnp.concatenate([y_pred_pos, zeros], axis=-1)
    neg_loss = jax.scipy.special.logsumexp(y_pred_neg, axis=-1)
    pos_loss = jax.scipy.special.logsumexp(y_pred_pos, axis=-1)
    return (neg_loss + pos_loss).mean()


def global_pointer_ner_forward(seq_out, W, bias, attn_mask, labels=None):
    logits = global_pointer_pallas(seq_out, W, bias, attn_mask)
    if labels is None:
        return logits
    return multilabel_categorical_crossentropy(logits, labels), logits


# pure-JAX (f32) reference for the correctness check
def _reference(seq_out, W, bias, attn_mask):
    cos_pos, sin_pos = sinusoidal_cos_sin(S, HS)
    proj = seq_out @ W + bias                          # (B, S, OUT)
    proj = proj.reshape(B, S, HEADS, 2 * HS)
    qw, kw = proj[..., :HS], proj[..., HS:]
    cos = cos_pos[None, :, None, :]
    sin = sin_pos[None, :, None, :]

    def rot(t):
        t2 = jnp.stack([-t[..., 1::2], t[..., ::2]], axis=-1).reshape(t.shape)
        return t * cos + t2 * sin

    qw, kw = rot(qw), rot(kw)
    logits = jnp.einsum('bmhd,bnhd->bhmn', qw, kw)
    pad = attn_mask.astype(jnp.float32)[:, None, None, :]
    logits = logits * pad - (1.0 - pad) * BIG
    tril = jnp.tril(jnp.ones((S, S), jnp.float32), -1)
    logits = logits - tril * BIG
    return logits / (HS ** 0.5)


if __name__ == "__main__":
    key = jax.random.PRNGKey(0)
    k_emb, k_tok, k_w, k_b, k_lbl = jax.random.split(key, 5)

    # deterministic "BERT" stand-in: token embedding lookup -> sequence_output
    vocab = 50
    emb_table = jax.random.normal(k_emb, (vocab, H), jnp.float32) * 0.5
    token_ids = jax.random.randint(k_tok, (B, S), 0, vocab)
    # padding mask (lengths 8 and 6), matches attention_masks.gt(0)
    lengths = jnp.array([8, 6])
    attn_mask = (jnp.arange(S)[None, :] < lengths[:, None]).astype(jnp.int32)
    seq_out = emb_table[token_ids] * attn_mask[..., None]              # (B, S, H) f32

    # GlobalPointer dense params (deterministic init)
    W = jax.random.normal(k_w, (H, OUT), jnp.float32) * (1.0 / np.sqrt(H))
    bias = jax.random.normal(k_b, (OUT,), jnp.float32) * 0.01

    # inference path (labels=None)
    logits = global_pointer_ner_forward(seq_out, W, bias, attn_mask)
    logits = jax.block_until_ready(logits)

    # training path (with labels) -> (loss, logits)
    labels = jax.random.bernoulli(k_lbl, 0.05, (B, HEADS, S, S)).astype(jnp.int32)
    loss, _ = global_pointer_ner_forward(seq_out, W, bias, attn_mask, labels)
    loss = jax.block_until_ready(loss)

    # correctness check against the f32 reference (tolerance accounts for bf16
    # MXU operands in both the projection and the bilinear contraction).
    ref = _reference(seq_out, W, bias, attn_mask)
    np.testing.assert_allclose(np.asarray(logits), np.asarray(ref),
                               rtol=2e-2, atol=2e-2)
    assert np.isfinite(float(loss))

    print("KERNEL_OK")
</pallas_src>

<mosaic_0001>
module attributes {stable_mosaic.version = 11 : i64} {
  func.func @_global_pointer_kernel(%arg0: i32, %arg1: memref<1x8x64xbf16, #tpu.memory_space<vmem>>, %arg2: memref<64x128xbf16, #tpu.memory_space<vmem>>, %arg3: memref<1x128xf32, #tpu.memory_space<vmem>>, %arg4: memref<3x8x128xf32, #tpu.memory_space<vmem>>, %arg5: memref<1x1x8xf32, #tpu.memory_space<vmem>>, %arg6: memref<1x4x8x8xf32, #tpu.memory_space<vmem>>) attributes {dimension_semantics = [#tpu.dimension_semantics<parallel>], iteration_bounds = array<i64: 2>, scalar_prefetch = 0 : i64, scratch_operands = 0 : i64, tpu.core_type = #tpu.core_type<tc>, window_params = [{transform_indices = @transform_0, window_bounds = array<i64: 1, 8, 64>}, {pipeline_mode = #tpu.pipeline_mode<synchronous>, transform_indices = @transform_1, window_bounds = array<i64: 64, 128>}, {pipeline_mode = #tpu.pipeline_mode<synchronous>, transform_indices = @transform_2, window_bounds = array<i64: 1, 128>}, {pipeline_mode = #tpu.pipeline_mode<synchronous>, transform_indices = @transform_3, window_bounds = array<i64: 3, 8, 128>}, {transform_indices = @transform_4, window_bounds = array<i64: 1, 1, 8>}, {transform_indices = @transform_5, window_bounds = array<i64: 1, 4, 8, 8>}]} {
    %c0 = arith.constant 0 : index
    %c0_0 = arith.constant 0 : index
    %c0_1 = arith.constant 0 : index
    %0 = vector.load %arg1[%c0, %c0_0, %c0_1] : memref<1x8x64xbf16, #tpu.memory_space<vmem>>, vector<1x8x64xbf16>
    %1 = vector.shape_cast %0 : vector<1x8x64xbf16> to vector<8x64xbf16>
    %c0_2 = arith.constant 0 : index
    %c0_3 = arith.constant 0 : index
    %2 = vector.load %arg2[%c0_2, %c0_3] : memref<64x128xbf16, #tpu.memory_space<vmem>>, vector<64x128xbf16>
    %cst = arith.constant dense<0.000000e+00> : vector<8x128xf32>
    %3 = tpu.matmul %1, %2, %cst {dimension_numbers = #tpu.dot_dimension_numbers<[1], [0], [0], [1], [0, 0, 1, 1], [], []>} : vector<8x64xbf16>, vector<64x128xbf16>, vector<8x128xf32> -> vector<8x128xf32>
    %c0_4 = arith.constant 0 : index
    %c0_5 = arith.constant 0 : index
    %4 = vector.load %arg3[%c0_4, %c0_5] : memref<1x128xf32, #tpu.memory_space<vmem>>, vector<1x128xf32>
    %5 = vector.broadcast %4 : vector<1x128xf32> to vector<8x128xf32>
    %6 = arith.addf %3, %5 : vector<8x128xf32>
    %c127_i32 = arith.constant 127 : i32
    %7 = tpu.dynamic_rotate %6 by %c127_i32 dim 1 : vector<8x128xf32>, i32 -> vector<8x128xf32>
    %c1_i32 = arith.constant 1 : i32
    %8 = tpu.dynamic_rotate %6 by %c1_i32 dim 1 : vector<8x128xf32>, i32 -> vector<8x128xf32>
    %c0_6 = arith.constant 0 : index
    %c0_7 = arith.constant 0 : index
    %c0_8 = arith.constant 0 : index
    %9 = vector.load %arg4[%c0_6, %c0_7, %c0_8] : memref<3x8x128xf32, #tpu.memory_space<vmem>>, vector<1x8x128xf32>
    %10 = vector.shape_cast %9 : vector<1x8x128xf32> to vector<8x128xf32>
    %11 = arith.mulf %6, %10 : vector<8x128xf32>
    %c1 = arith.constant 1 : index
    %c0_9 = arith.constant 0 : index
    %c0_10 = arith.constant 0 : index
    %12 = vector.load %arg4[%c1, %c0_9, %c0_10] : memref<3x8x128xf32, #tpu.memory_space<vmem>>, vector<1x8x128xf32>
    %13 = vector.shape_cast %12 : vector<1x8x128xf32> to vector<8x128xf32>
    %14 = arith.mulf %7, %13 : vector<8x128xf32>
    %15 = arith.addf %11, %14 : vector<8x128xf32>
    %c2 = arith.constant 2 : index
    %c0_11 = arith.constant 0 : index
    %c0_12 = arith.constant 0 : index
    %16 = vector.load %arg4[%c2, %c0_11, %c0_12] : memref<3x8x128xf32, #tpu.memory_space<vmem>>, vector<1x8x128xf32>
    %17 = vector.shape_cast %16 : vector<1x8x128xf32> to vector<8x128xf32>
    %18 = arith.mulf %8, %17 : vector<8x128xf32>
    %19 = arith.addf %15, %18 : vector<8x128xf32>
    %20 = arith.truncf %19 : vector<8x128xf32> to vector<8x128xbf16>
    %21 = vector.extract_strided_slice %20 {offsets = [0, 0], sizes = [8, 16], strides = [1, 1]} : vector<8x128xbf16> to vector<8x16xbf16>
    %22 = vector.extract_strided_slice %20 {offsets = [0, 16], sizes = [8, 16], strides = [1, 1]} : vector<8x128xbf16> to vector<8x16xbf16>
    %23 = vector.extract_strided_slice %20 {offsets = [0, 32], sizes = [8, 16], strides = [1, 1]} : vector<8x128xbf16> to vector<8x16xbf16>
    %24 = vector.extract_strided_slice %20 {offsets = [0, 48], sizes = [8, 16], strides = [1, 1]} : vector<8x128xbf16> to vector<8x16xbf16>
    %25 = vector.shape_cast %21 : vector<8x16xbf16> to vector<1x8x16xbf16>
    %26 = vector.shape_cast %22 : vector<8x16xbf16> to vector<1x8x16xbf16>
    %27 = vector.shape_cast %23 : vector<8x16xbf16> to vector<1x8x16xbf16>
    %28 = vector.shape_cast %24 : vector<8x16xbf16> to vector<1x8x16xbf16>
    %29 = tpu.concatenate %25, %26, %27, %28 in 0 : vector<1x8x16xbf16>, vector<1x8x16xbf16>, vector<1x8x16xbf16>, vector<1x8x16xbf16> -> vector<4x8x16xbf16>
    %30 = vector.extract_strided_slice %20 {offsets = [0, 64], sizes = [8, 16], strides = [1, 1]} : vector<8x128xbf16> to vector<8x16xbf16>
    %31 = vector.extract_strided_slice %20 {offsets = [0, 80], sizes = [8, 16], strides = [1, 1]} : vector<8x128xbf16> to vector<8x16xbf16>
    %32 = vector.extract_strided_slice %20 {offsets = [0, 96], sizes = [8, 16], strides = [1, 1]} : vector<8x128xbf16> to vector<8x16xbf16>
    %33 = vector.extract_strided_slice %20 {offsets = [0, 112], sizes = [8, 16], strides = [1, 1]} : vector<8x128xbf16> to vector<8x16xbf16>
    %34 = vector.shape_cast %30 : vector<8x16xbf16> to vector<1x8x16xbf16>
    %35 = vector.shape_cast %31 : vector<8x16xbf16> to vector<1x8x16xbf16>
    %36 = vector.shape_cast %32 : vector<8x16xbf16> to vector<1x8x16xbf16>
    %37 = vector.shape_cast %33 : vector<8x16xbf16> to vector<1x8x16xbf16>
    %38 = tpu.concatenate %34, %35, %36, %37 in 0 : vector<1x8x16xbf16>, vector<1x8x16xbf16>, vector<1x8x16xbf16>, vector<1x8x16xbf16> -> vector<4x8x16xbf16>
    "tpu.trace_start"() <{level = 10 : i32, message = "hmd,hnd->hmn"}> : () -> ()
    %cst_13 = arith.constant dense<0.000000e+00> : vector<4x8x8xf32>
    %39 = tpu.matmul %29, %38, %cst_13 {dimension_numbers = #tpu.dot_dimension_numbers<[2], [2], [1], [1], [0, 0, 0, 1, 1, 1], [0], [0]>} : vector<4x8x16xbf16>, vector<4x8x16xbf16>, vector<4x8x8xf32> -> vector<4x8x8xf32>
    "tpu.trace_stop"() : () -> ()
    %c0_14 = arith.constant 0 : index
    %c0_15 = arith.constant 0 : index
    %c0_16 = arith.constant 0 : index
    %40 = vector.load %arg5[%c0_14, %c0_15, %c0_16] : memref<1x1x8xf32, #tpu.memory_space<vmem>>, vector<1x1x8xf32>
    %41 = vector.shape_cast %40 : vector<1x1x8xf32> to vector<1x8xf32>
    %42 = tpu.iota {dimensions = array<i32: 0>} : vector<8x8xi32>
    %43 = tpu.iota {dimensions = array<i32: 1>} : vector<8x8xi32>
    %44 = arith.cmpi sgt, %42, %43 : vector<8x8xi32>
    %45 = arith.extui %44 : vector<8x8xi1> to vector<8x8xi32>
    %46 = arith.sitofp %45 : vector<8x8xi32> to vector<8x8xf32>
    %cst_17 = arith.constant 1.000000e+00 : f32
    %47 = vector.broadcast %cst_17 : f32 to vector<1x8xf32>
    %48 = arith.subf %47, %41 : vector<1x8xf32>
    %49 = vector.broadcast %48 : vector<1x8xf32> to vector<8x8xf32>
    %50 = arith.addf %49, %46 : vector<8x8xf32>
    %cst_18 = arith.constant -2.500000e+11 : f32
    %51 = vector.broadcast %cst_18 : f32 to vector<8x8xf32>
    %52 = arith.mulf %51, %50 : vector<8x8xf32>
    %53 = vector.shape_cast %41 : vector<1x8xf32> to vector<1x1x8xf32>
    %54 = vector.broadcast %53 : vector<1x1x8xf32> to vector<4x8x8xf32>
    %55 = arith.mulf %39, %54 : vector<4x8x8xf32>
    %56 = vector.shape_cast %52 : vector<8x8xf32> to vector<1x8x8xf32>
    %57 = vector.broadcast %56 : vector<1x8x8xf32> to vector<4x8x8xf32>
    %58 = arith.addf %55, %57 : vector<4x8x8xf32>
    %c0_19 = arith.constant 0 : index
    %c0_20 = arith.constant 0 : index
    %c0_21 = arith.constant 0 : index
    %c0_22 = arith.constant 0 : index
    %59 = vector.load %arg6[%c0_19, %c0_20, %c0_21, %c0_22] : memref<1x4x8x8xf32, #tpu.memory_space<vmem>>, vector<1x4x8x8xf32>
    %60 = vector.shape_cast %59 : vector<1x4x8x8xf32> to vector<4x8x8xf32>
    %61 = vector.shape_cast %58 : vector<4x8x8xf32> to vector<1x4x8x8xf32>
    tpu.vector_store %arg6[%c0_19, %c0_20, %c0_21, %c0_22], %61 {strides = array<i32>} : memref<1x4x8x8xf32, #tpu.memory_space<vmem>>, vector<1x4x8x8xf32>,
    return
  }
  func.func @transform_0(%arg0: i32) -> (i32, i32, i32) {
    %c0_i32 = arith.constant 0 : i32
    %c0_i32_0 = arith.constant 0 : i32
    %c0_i32_1 = arith.constant 0 : i32
    return %arg0, %c0_i32, %c0_i32_0 : i32, i32, i32
  }
  func.func @transform_1(%arg0: i32) -> (i32, i32) {
    %c0_i32 = arith.constant 0 : i32
    %c0_i32_0 = arith.constant 0 : i32
    %c0_i32_1 = arith.constant 0 : i32
    return %c0_i32, %c0_i32_0 : i32, i32
  }
  func.func @transform_2(%arg0: i32) -> (i32, i32) {
    %c0_i32 = arith.constant 0 : i32
    %c0_i32_0 = arith.constant 0 : i32
    %c0_i32_1 = arith.constant 0 : i32
    return %c0_i32, %c0_i32_0 : i32, i32
  }
  func.func @transform_3(%arg0: i32) -> (i32, i32, i32) {
    %c0_i32 = arith.constant 0 : i32
    %c0_i32_0 = arith.constant 0 : i32
    %c0_i32_1 = arith.constant 0 : i32
    %c0_i32_2 = arith.constant 0 : i32
    return %c0_i32, %c0_i32_0, %c0_i32_1 : i32, i32, i32
  }
  func.func @transform_4(%arg0: i32) -> (i32, i32, i32) {
    %c0_i32 = arith.constant 0 : i32
    %c0_i32_0 = arith.constant 0 : i32
    %c0_i32_1 = arith.constant 0 : i32
    return %arg0, %c0_i32, %c0_i32_0 : i32, i32, i32
  }
  func.func @transform_5(%arg0: i32) -> (i32, i32, i32, i32) {
    %c0_i32 = arith.constant 0 : i32
    %c0_i32_0 = arith.constant 0 : i32
    %c0_i32_1 = arith.constant 0 : i32
    %c0_i32_2 = arith.constant 0 : i32
    return %arg0, %c0_i32, %c0_i32_0, %c0_i32_1 : i32, i32, i32, i32
  }
}

</mosaic_0001>

<llo_original>
// kernel: tpu_custom_call.1
$region0: #{tpu_custom_call.1}
  #allocation0 [shape = 'u32[]', space=smem, size = 0x4, offset = 0x4, fixed_abs, tag = 'smem constant byte address 0x4 - core index']
  #allocation1 [shape = 'u32[144,128]{1,0:T(1,128)}', space=vmem, size = 0x12000, scoped, tag = 'internal scratch']
  %s0 = inlined_call_operand.hbm [shape: bf16[2,8,64], index: 0, kind: input, shape index: {}]
  %s1 = inlined_call_operand.hbm [shape: bf16[64,128], index: 1, kind: input, shape index: {}]
  %s2 = inlined_call_operand.vmem [shape: f32[1,128], index: 2, kind: input, shape index: {}]
  %s3 = inlined_call_operand.hbm [shape: f32[3,8,128], index: 3, kind: input, shape index: {}]
  %s4 = inlined_call_operand.vmem [shape: f32[2,1,8], index: 4, kind: input, shape index: {}]
  %s5 = inlined_call_operand.hbm [shape: f32[2,4,8,8], index: 5, kind: output, shape index: {}]
  %s6 = sld [smem:[#allocation0]]
  $region65: #{tpu_custom_call.1} parent=0
    _
  %s8 = ssub.s32 1, %s6
  %s9 = scalar_select 0, %s8, %s6
  $region1: #{tpu_custom_call.1} parent=0
    #allocation2 [shape = 'u8[4096]{0}', space=vmem, size = 0x1000, scoped, tag = 'input window, operand 0']
    #allocation3 [shape = 's32[2]{0}', space=sflag, size = 0x8, scoped, tag = 'scoped memory for tpu_custom_call.1']
    #allocation4 [shape = 's32[2]{0}', space=sflag, size = 0x8, scoped, tag = 'scoped memory for tpu_custom_call.1']
    #allocation5 [shape = 'u8[16384]{0}', space=vmem, size = 0x4000, scoped, tag = 'input window, operand 1, single buffered']
    #allocation6 [shape = 's32[1]{0}', space=sflag, size = 0x4, scoped, tag = 'scoped memory for tpu_custom_call.1']
    #allocation7 [shape = 'u8[12288]{0}', space=vmem, size = 0x3000, scoped, tag = 'input window, operand 3, single buffered']
    #allocation8 [shape = 'u8[32768]{0}', space=vmem, size = 0x8000, scoped, tag = 'output window, operand 0']
    %10 = vsyncpa [#allocation3], 0
    %s11 = scalar_lea.sflag [#allocation3], 1
    %12 = vsyncpa %s11, 0
    %13 = vsyncpa [#allocation6], 0
    %14 = vsyncpa [#allocation4], 0
    %s15 = scalar_lea.sflag [#allocation4], 1
    %16 = vsyncpa %s15, 0
    loop: start=0, step=1, limit=4
    $region2: #{tpu_custom_call.1} parent=1 // loop_pre_header
      _
    $region3: #{tpu_custom_call.1} parent=1 // loop_header
      %s18 = sphi 0, %s22
      %p19 = scmp.ge.s32.totalorder %s18, 4
      %s28 = sphi 0, %s30
      %s31 = sphi 0, %s28
      %s32 = sphi 0, %s31
      %s48 = sphi 0, %s32
      %s52 = sphi 0, %s52
      %s54 = sphi 0, %s52
      %s55 = sphi 0, %s54
      %s69 = sphi 0, %s55
      %s73 = sphi 0, %s73
      %s75 = sphi 0, %s73
      %s76 = sphi 0, %s75
      %s90 = sphi 0, %s76
      %s94 = sphi 0, %s94
      %s96 = sphi 0, %s94
      %s97 = sphi 0, %s96
      %s111 = sphi 0, %s97
      %s117 = sphi 0, %s119
      %s120 = sphi 0, %s117
      %s121 = sphi 0, %s120
      %s137 = sphi 0, %s121
      %s143 = sphi 0, %s145
      %s146 = sphi 0, %s143
      %s147 = sphi 0, %s146
      %s163 = sphi 0, %s147
    $region4: #{tpu_custom_call.1} parent=1 // loop_header_branch
      %21 = sbr.rel (%p19) target = $region8
    $region5: #{tpu_custom_call.1} parent=1 // loop_body
      %s23 = ssub.s32 %s18, 1
      %s24 = ssub.s32 %s18, 2
      %s25 = sadd.s32 %s18, 1
      %s26 = ssub.s32 %s18, %s25
      %p27 = scmp.eq.s32.totalorder %s26, 0
      %s29 = sadd.s32 %s28, 1
      %s30 = scalar_select %p27, %s28, %s29
      %p33 = pneg %p27
      %p34 = scmp.eq.s32.totalorder %s18, 1
      %p35 = por %p33, %p34
      %p36 = scmp.ne.s32.totalorder %s28, %s31
      %p37 = scmp.eq.s32.totalorder %s18, 0
      %p38 = por %p36, %p37
      %p39 = scmp.ne.s32.totalorder %s28, %s31
      %p40 = scmp.eq.s32.totalorder %s23, 1
      %p41 = por %p39, %p40
      %p42 = scmp.ne.s32.totalorder %s31, %s32
      %p43 = scmp.eq.s32.totalorder %s23, 0
      %p44 = por %p42, %p43
      %p45 = scmp.ne.s32.totalorder %s31, %s32
      %p46 = scmp.eq.s32.totalorder %s24, 1
      %p47 = por %p45, %p46
      %p49 = scmp.ne.s32.totalorder %s32, %s48
      %p50 = scmp.eq.s32.totalorder %s24, 0
      %p51 = por %p49, %p50
      %s53 = sadd.s32 %s52, 1
      %p56 = scmp.eq.s32.totalorder %s18, 1
      %p57 = scmp.ne.s32.totalorder %s52, %s54
      %p58 = scmp.eq.s32.totalorder %s18, 0
      %p59 = por %p57, %p58
      %p60 = scmp.ne.s32.totalorder %s52, %s54
      %p61 = scmp.eq.s32.totalorder %s23, 1
      %p62 = por %p60, %p61
      %p63 = scmp.ne.s32.totalorder %s54, %s55
      %p64 = scmp.eq.s32.totalorder %s23, 0
      %p65 = por %p63, %p64
      %p66 = scmp.ne.s32.totalorder %s54, %s55
      %p67 = scmp.eq.s32.totalorder %s24, 1
      %p68 = por %p66, %p67
      %p70 = scmp.ne.s32.totalorder %s55, %s69
      %p71 = scmp.eq.s32.totalorder %s24, 0
      %p72 = por %p70, %p71
      %s74 = sadd.s32 %s73, 1
      %p77 = scmp.eq.s32.totalorder %s18, 1
      %p78 = scmp.ne.s32.totalorder %s73, %s75
      %p79 = scmp.eq.s32.totalorder %s18, 0
      %p80 = por %p78, %p79
      %p81 = scmp.ne.s32.totalorder %s73, %s75
      %p82 = scmp.eq.s32.totalorder %s23, 1
      %p83 = por %p81, %p82
      %p84 = scmp.ne.s32.totalorder %s75, %s76
      %p85 = scmp.eq.s32.totalorder %s23, 0
      %p86 = por %p84, %p85
      %p87 = scmp.ne.s32.totalorder %s75, %s76
      %p88 = scmp.eq.s32.totalorder %s24, 1
      %p89 = por %p87, %p88
      %p91 = scmp.ne.s32.totalorder %s76, %s90
      %p92 = scmp.eq.s32.totalorder %s24, 0
      %p93 = por %p91, %p92
      %s95 = sadd.s32 %s94, 1
      %p98 = scmp.eq.s32.totalorder %s18, 1
      %p99 = scmp.ne.s32.totalorder %s94, %s96
      %p100 = scmp.eq.s32.totalorder %s18, 0
      %p101 = por %p99, %p100
      %p102 = scmp.ne.s32.totalorder %s94, %s96
      %p103 = scmp.eq.s32.totalorder %s23, 1
      %p104 = por %p102, %p103
      %p105 = scmp.ne.s32.totalorder %s96, %s97
      %p106 = scmp.eq.s32.totalorder %s23, 0
      %p107 = por %p105, %p106
      %p108 = scmp.ne.s32.totalorder %s96, %s97
      %p109 = scmp.eq.s32.totalorder %s24, 1
      %p110 = por %p108, %p109
      %p112 = scmp.ne.s32.totalorder %s97, %s111
      %p113 = scmp.eq.s32.totalorder %s24, 0
      %p114 = por %p112, %p113
      %s115 = ssub.s32 %s18, %s25
      %p116 = scmp.eq.s32.totalorder %s115, 0
      %s118 = sadd.s32 %s117, 1
      %s119 = scalar_select %p116, %s117, %s118
      %p122 = pneg %p116
      %p123 = scmp.eq.s32.totalorder %s18, 1
      %p124 = por %p122, %p123
      %p125 = scmp.ne.s32.totalorder %s117, %s120
      %p126 = scmp.eq.s32.totalorder %s18, 0
      %p127 = por %p125, %p126
      %p128 = scmp.ne.s32.totalorder %s117, %s120
      %p129 = scmp.eq.s32.totalorder %s23, 1
      %p130 = por %p128, %p129
      %p131 = scmp.ne.s32.totalorder %s120, %s121
      %p132 = scmp.eq.s32.totalorder %s23, 0
      %p133 = por %p131, %p132
      %p134 = scmp.ne.s32.totalorder %s120, %s121
      %p135 = scmp.eq.s32.totalorder %s24, 1
      %p136 = por %p134, %p135
      %p138 = scmp.ne.s32.totalorder %s121, %s137
      %p139 = scmp.eq.s32.totalorder %s24, 0
      %p140 = por %p138, %p139
      %s141 = ssub.s32 %s18, %s25
      %p142 = scmp.eq.s32.totalorder %s141, 0
      %s144 = sadd.s32 %s143, 1
      %s145 = scalar_select %p142, %s143, %s144
      %p148 = pneg %p142
      %p149 = scmp.eq.s32.totalorder %s18, 1
      %p150 = por %p148, %p149
      %p151 = scmp.ne.s32.totalorder %s143, %s146
      %p152 = scmp.eq.s32.totalorder %s18, 0
      %p153 = por %p151, %p152
      %p154 = scmp.ne.s32.totalorder %s143, %s146
      %p155 = scmp.eq.s32.totalorder %s23, 1
      %p156 = por %p154, %p155
      %p157 = scmp.ne.s32.totalorder %s146, %s147
      %p158 = scmp.eq.s32.totalorder %s23, 0
      %p159 = por %p157, %p158
      %p160 = scmp.ne.s32.totalorder %s146, %s147
      %p161 = scmp.eq.s32.totalorder %s24, 1
      %p162 = por %p160, %p161
      %p164 = scmp.ne.s32.totalorder %s147, %s163
      %p165 = scmp.eq.s32.totalorder %s24, 0
      %p166 = por %p164, %p165
      %p167 = scmp.le.s32.totalorder 1, %s18
      %p168 = scmp.lt.s32.totalorder %s18, 3
      %p169 = pnand %p167, %p168
      %p170 = pneg %p169
      // Predicated region
      $region9: #{tpu_custom_call.1} parent=5 // pred_check
        _
      $region10: #{tpu_custom_call.1} parent=5 // pred_check_branch
        %172 = sbr.rel (%p169) target = $region12
      $region11: #{tpu_custom_call.1} parent=5 // pred_region
        %s173 = ssub.s32 %s18, 1
        // Predicated region
        $region13: #{tpu_custom_call.1} parent=11 // pred_check
          %p174 = pneg %p65
        $region14: #{tpu_custom_call.1} parent=11 // pred_check_branch
          %176 = sbr.rel (%p174) target = $region16
        $region15: #{tpu_custom_call.1} parent=11 // pred_region
          %s178 = ssub.s32 512, 512
          %179 = vsyncadd [#allocation6], %s178
          %s180 = sshll.u32 [#allocation5], 4
          %s181 = int_to_ptr.vmem [resolvable:$true] %s180
          %186 = dma.hbm_to_vmem [thread:$0]  %s1, 512, %s181, [#allocation6], 64, 64, 4
        $region16: #{tpu_custom_call.1} parent=11 // pred_fallthru
          _
        // Predicated region
        $region17: #{tpu_custom_call.1} parent=11 // pred_check
          %p187 = pneg %p86
        $region18: #{tpu_custom_call.1} parent=11 // pred_check_branch
          %189 = sbr.rel (%p187) target = $region20
        $region19: #{tpu_custom_call.1} parent=11 // pred_region
          _
        $region20: #{tpu_custom_call.1} parent=11 // pred_fallthru
          _
        // Predicated region
        $region21: #{tpu_custom_call.1} parent=11 // pred_check
          %p190 = pneg %p107
        $region22: #{tpu_custom_call.1} parent=11 // pred_check_branch
          %192 = sbr.rel (%p190) target = $region24
        $region23: #{tpu_custom_call.1} parent=11 // pred_region
          %s194 = ssub.s32 384, 384
          %195 = vsyncadd [#allocation6], %s194
          %s196 = sshll.u32 [#allocation7], 4
          %s197 = int_to_ptr.vmem [resolvable:$true] %s196
          %202 = dma.hbm_to_vmem [thread:$0]  %s3, 384, %s197, [#allocation6], 128, 128, 8
        $region24: #{tpu_custom_call.1} parent=11 // pred_fallthru
          _
      $region12: #{tpu_custom_call.1} parent=5 // pred_fallthru
        _
      %p203 = scmp.lt.s32.totalorder %s18, 2
      // Predicated region
      $region25: #{tpu_custom_call.1} parent=5 // pred_check
        %p204 = pneg %p203
      $region26: #{tpu_custom_call.1} parent=5 // pred_check_branch
        %206 = sbr.rel (%p204) target = $region28
      $region27: #{tpu_custom_call.1} parent=5 // pred_region
        // Predicated region
        $region29: #{tpu_custom_call.1} parent=27 // pred_check
          %p207 = pneg %p38
        $region30: #{tpu_custom_call.1} parent=27 // pred_check_branch
          %209 = sbr.rel (%p207) target = $region32
        $region31: #{tpu_custom_call.1} parent=27 // pred_region
          %s210 = sand.u32 %s28, 1
          %s211 = scalar_lea.sflag [#allocation3], %s210
          %s212 = sand.u32 %s28, 1
          %s213 = smul.addr %s212, 4
          %s214 = scalar_lea.vmem [#allocation2], %s213
          %s216 = ssub.s32 64, 64
          %217 = vsyncadd %s211, %s216
          %s218 = smul.addr %s18, 64
          %s219 = scalar_lea.hbm %s0, %s218
          %s221 = sshll.u32 %s214, 4
          %s222 = int_to_ptr.vmem [resolvable:$true] %s221
          %224 = dma.hbm_to_vmem [thread:$0]  %s219, 64, %s222, %s211
        $region32: #{tpu_custom_call.1} parent=27 // pred_fallthru
          _
        // Predicated region
        $region33: #{tpu_custom_call.1} parent=27 // pred_check
          %p225 = pneg %p127
        $region34: #{tpu_custom_call.1} parent=27 // pred_check_branch
          %227 = sbr.rel (%p225) target = $region36
        $region35: #{tpu_custom_call.1} parent=27 // pred_region
          %p228 = scmp.lt.s32.totalorder %s18, 1
          %s229 = scalar_select %p228, %s18, 1
          %s230 = scalar_lea.vmem %s4, %s229
        $region36: #{tpu_custom_call.1} parent=27 // pred_fallthru
          _
      $region28: #{tpu_custom_call.1} parent=5 // pred_fallthru
        _
      %p231 = scmp.le.s32.totalorder 1, %s18
      %p232 = scmp.lt.s32.totalorder %s18, 3
      %p233 = pnand %p231, %p232
      %p234 = pneg %p233
      // Predicated region
      $region37: #{tpu_custom_call.1} parent=5 // pred_check
        _
      $region38: #{tpu_custom_call.1} parent=5 // pred_check_branch
        %236 = sbr.rel (%p233) target = $region40
      $region39: #{tpu_custom_call.1} parent=5 // pred_region
        %s237 = ssub.s32 %s18, 1
        %s238 = sand.u32 %s31, 1
        %s239 = scalar_lea.sflag [#allocation3], %s238
        %s240 = sand.u32 %s31, 1
        %s241 = smul.addr %s240, 4
        %s242 = scalar_lea.vmem [#allocation2], %s241
        // Predicated region
        $region41: #{tpu_custom_call.1} parent=39 // pred_check
          %p243 = pneg %p44
        $region42: #{tpu_custom_call.1} parent=39 // pred_check_branch
          %245 = sbr.rel (%p243) target = $region44
        $region43: #{tpu_custom_call.1} parent=39 // pred_region
          %246 = dma.done %s239, 64
        $region44: #{tpu_custom_call.1} parent=39 // pred_fallthru
          _
        // Predicated region
        $region45: #{tpu_custom_call.1} parent=39 // pred_check
          %p247 = pneg %p65
        $region46: #{tpu_custom_call.1} parent=39 // pred_check_branch
          %249 = sbr.rel (%p247) target = $region48
        $region47: #{tpu_custom_call.1} parent=39 // pred_region
          %250 = dma.done [#allocation6], 512
        $region48: #{tpu_custom_call.1} parent=39 // pred_fallthru
          _
        // Predicated region
        $region49: #{tpu_custom_call.1} parent=39 // pred_check
          %p251 = pneg %p107
        $region50: #{tpu_custom_call.1} parent=39 // pred_check_branch
          %253 = sbr.rel (%p251) target = $region52
        $region51: #{tpu_custom_call.1} parent=39 // pred_region
          %254 = dma.done [#allocation6], 384
        $region52: #{tpu_custom_call.1} parent=39 // pred_fallthru
          _
        %s255 = sand.u32 %s31, 1
        %s256 = scalar_lea.sflag [#allocation3], %s255
        %s257 = sand.u32 %s31, 1
        %s258 = smul.addr %s257, 4
        %s259 = scalar_lea.vmem [#allocation2], %s258
        %p260 = pneg %p44
        %p261 = pneg %p41
        %p262 = pneg %p65
        %p263 = pneg %p62
        %p264 = pneg %p86
        %p265 = pneg %p83
        %p266 = pneg %p107
        %p267 = pneg %p104
        %p268 = scmp.lt.s32.totalorder %s23, 1
        %s269 = scalar_select %p268, %s23, 1
        %s270 = scalar_lea.vmem %s4, %s269
        %p271 = pneg %p133
        %p272 = pneg %p130
        %p273 = pneg %p159
        %p274 = pneg %p156
        %s275 = sand.u32 %s146, 1
        %s276 = scalar_lea.sflag [#allocation4], %s275
        %s277 = sand.u32 %s146, 1
        %s278 = smul.addr %s277, 32
        %s279 = scalar_lea.vmem [#allocation8], %s278
        %p280 = scmp.lt.s32.totalorder %s23, 1
        %s281 = scalar_select %p280, %s23, 1
        %s282 = scalar_lea.vmem %s4, %s281
        %v284 = vld [vmem:[%s242] sm:$0xf]
        %v285 = vld [vmem:[#allocation5] sm:$0xf]
        %v286 = vld [vmem:[#allocation5 + $0x4] sm:$0xf]
        %v287 = vld [vmem:[#allocation5 + $0x8] sm:$0xf]
        %v288 = vld [vmem:[#allocation5 + $0xc] sm:$0xf]
        %v289 = vld [vmem:[#allocation5 + $0x10] sm:$0xf]
        %v290 = vld [vmem:[#allocation5 + $0x14] sm:$0xf]
        %v291 = vld [vmem:[#allocation5 + $0x18] sm:$0xf]
        %v292 = vld [vmem:[#allocation5 + $0x1c] sm:$0xf]
        %v293 = vld [vmem:[%s2] sm:$0x1]
        %v295 = vlaneseq
        %v296 = vshrl.u32 %v295, 7
        %v297 = vsub.s32 0, %v296
        %v298 = vrot.slane %v293, %v297
        %v308 = vunpack.c.l.b16 %v285
        %v309 = vunpack.c.l.b16 %v286
        %v310 = vunpack.c.l.b16 %v287
        %v311 = vunpack.c.l.b16 %v288
        %v312 = vunpack.c.l.b16 %v289
        %v313 = vunpack.c.l.b16 %v290
        %v314 = vunpack.c.l.b16 %v291
        %v315 = vunpack.c.l.b16 %v292
        %v316 = vpack.c.b16 %v309, %v308
        %v317 = vpack.c.b16 %v311, %v310
        %v318 = vpack.c.b16 %v313, %v312
        %v319 = vpack.c.b16 %v315, %v314
        %vm324 = vcmask 523264
        %v326 = vsel %vm324, %v284, 0
        %328 = vmatprep.subr.bf16.mxu0 0
        %329 = vmatpush1.bf16.msra.mxu0 0
        %330 = vmatprep.subr.bf16.mxu0 0
        %331 = vmatpush1.bf16.msra.mxu0 0
        %332 = vmatprep.subr.bf16.mxu0 0
        %333 = vmatpush1.bf16.msra.mxu0 0
        %334 = vmatprep.subr.bf16.mxu0 0
        %335 = vmatpush1.bf16.msra.mxu0 0
        %336 = vmatprep.subr.bf16.mxu0 0
        %337 = vmatpush1.bf16.msra.mxu0 %v319
        %338 = vmatprep.subr.bf16.mxu0 0
        %339 = vmatpush1.bf16.msra.mxu0 %v318
        %340 = vmatprep.subr.bf16.mxu0 0
        %341 = vmatpush1.bf16.msra.mxu0 %v317
        %342 = vmatprep.subr.bf16.mxu0 0
        %343 = vmatpush1.bf16.msra.mxu0 %v316
        %344 = vmatprep.subr.bf16.mxu0 0
        %345 = vmatpush2.bf16.msra.mxu0 0
        %346 = vmatprep.subr.bf16.mxu0 0
        %347 = vmatpush2.bf16.msra.mxu0 0
        %348 = vmatprep.subr.bf16.mxu0 0
        %349 = vmatpush2.bf16.msra.mxu0 0
        %350 = vmatprep.subr.bf16.mxu0 0
        %351 = vmatpush2.bf16.msra.mxu0 0
        %352 = vmatprep.subr.bf16.mxu0 0
        %353 = vmatpush2.bf16.msra.mxu0 0
        %354 = vmatprep.subr.bf16.mxu0 0
        %355 = vmatpush2.bf16.msra.mxu0 0
        %356 = vmatprep.subr.bf16.mxu0 0
        %357 = vmatpush2.bf16.msra.mxu0 0
        %358 = vmatprep.subr.bf16.mxu0 0
        %359 = vmatpush2.bf16.msra.mxu0 0
        %360 = vmatprep.mubr.bf16.mxu0 0
        %361 = vmatmul.mubr.bf16.gmra.mxu0 %v326
        %v362 = vpop.f32.mrf.mxu0
        %v363 = vadd.f32 %v298, %v362
        %v364 = vpop.f32.mrf.mxu0
        %v365 = vpop.f32.mrf.mxu0
        %v366 = vpop.f32.mrf.mxu0
        %367 = vdwg.mxu0
        %368 = vrot.lane.b32.xlu0 %v363, 127
        %v369 = vpop.permute.xlu0 %368
        %370 = vrot.lane.b32.xlu0 %v363, 1
        %v371 = vpop.permute.xlu0 %370
        %v372 = vld [vmem:[#allocation7] sm:$0xff]
        %v373 = vmul.f32 %v363, %v372
        %s374 = scalar_lea.vmem [#allocation7], 8
        %v375 = vld [vmem:[%s374] sm:$0xff]
        %v376 = vmul.f32 %v369, %v375
        %v377 = vadd.f32 %v373, %v376
        %s378 = scalar_lea.vmem [#allocation7], 16
        %v379 = vld [vmem:[%s378] sm:$0xff]
        %v380 = vmul.f32 %v371, %v379
        %v381 = vadd.f32 %v377, %v380
        %v382 = vpack.c.bf16 %v381, %v381
        %384 = vrot.lane.b32.xlu0 %v382, 112
        %v385 = vpop.permute.xlu0 %384
        %386 = vrot.lane.b32.xlu0 %v382, 96
        %v387 = vpop.permute.xlu0 %386
        %388 = vrot.lane.b32.xlu0 %v382, 80
        %v389 = vpop.permute.xlu0 %388
        %390 = vrot.lane.b32.xlu0 %v382, 64
        %v391 = vpop.permute.xlu0 %390
        %vm392 = vcmask 130048
        %v394 = vsel %vm392, %v382, 0
        %v397 = vsel %vm392, %v391, 0
        %399 = vmatprep.subr.bf16.mxu0 0
        %400 = vmatpush1.bf16.xpose.msra.mxu0 0
        %401 = vmatprep.subr.bf16.mxu0 0
        %402 = vmatpush1.bf16.xpose.msra.mxu0 0
        %403 = vmatprep.subr.bf16.mxu0 0
        %404 = vmatpush1.bf16.xpose.msra.mxu0 0
        %405 = vmatprep.subr.bf16.mxu0 0
        %406 = vmatpush1.bf16.xpose.msra.mxu0 0
        %407 = vmatprep.subr.bf16.mxu0 0
        %408 = vmatpush1.bf16.xpose.msra.mxu0 0
        %409 = vmatprep.subr.bf16.mxu0 0
        %410 = vmatpush1.bf16.xpose.msra.mxu0 0
        %411 = vmatprep.subr.bf16.mxu0 0
        %412 = vmatpush1.bf16.xpose.msra.mxu0 0
        %413 = vmatprep.subr.bf16.mxu0 0
        %414 = vmatpush1.bf16.xpose.msra.mxu0 %v397
        %415 = vmatprep.subr.bf16.mxu0 0
        %416 = vmatpush2.bf16.xpose.msra.mxu0 0
        %417 = vmatprep.subr.bf16.mxu0 0
        %418 = vmatpush2.bf16.xpose.msra.mxu0 0
        %419 = vmatprep.subr.bf16.mxu0 0
        %420 = vmatpush2.bf16.xpose.msra.mxu0 0
        %421 = vmatprep.subr.bf16.mxu0 0
        %422 = vmatpush2.bf16.xpose.msra.mxu0 0
        %423 = vmatprep.subr.bf16.mxu0 0
        %424 = vmatpush2.bf16.xpose.msra.mxu0 0
        %425 = vmatprep.subr.bf16.mxu0 0
        %426 = vmatpush2.bf16.xpose.msra.mxu0 0
        %427 = vmatprep.subr.bf16.mxu0 0
        %428 = vmatpush2.bf16.xpose.msra.mxu0 0
        %429 = vmatprep.subr.bf16.mxu0 0
        %430 = vmatpush2.bf16.xpose.msra.mxu0 0
        %431 = vmatprep.mubr.bf16.mxu0 0
        %432 = vmatmul.mubr.bf16.gmra.mxu0 %v394
        %v433 = vpop.f32.mrf.mxu0
        %v434 = vadd.f32 0.0, %v433
        %v435 = vpop.f32.mrf.mxu0
        %v436 = vpop.f32.mrf.mxu0
        %v437 = vpop.f32.mrf.mxu0
        %438 = vdwg.mxu0
        %439 = vrot.lane.b32.xlu0 %v385, 64
        %v440 = vpop.permute.xlu0 %439
        %v442 = vsel %vm392, %v385, 0
        %v445 = vsel %vm392, %v440, 0
        %447 = vmatprep.subr.bf16.mxu0 0
        %448 = vmatpush1.bf16.xpose.msra.mxu0 0
        %449 = vmatprep.subr.bf16.mxu0 0
        %450 = vmatpush1.bf16.xpose.msra.mxu0 0
        %451 = vmatprep.subr.bf16.mxu0 0
        %452 = vmatpush1.bf16.xpose.msra.mxu0 0
        %453 = vmatprep.subr.bf16.mxu0 0
        %454 = vmatpush1.bf16.xpose.msra.mxu0 0
        %455 = vmatprep.subr.bf16.mxu0 0
        %456 = vmatpush1.bf16.xpose.msra.mxu0 0
        %457 = vmatprep.subr.bf16.mxu0 0
        %458 = vmatpush1.bf16.xpose.msra.mxu0 0
        %459 = vmatprep.subr.bf16.mxu0 0
        %460 = vmatpush1.bf16.xpose.msra.mxu0 0
        %461 = vmatprep.subr.bf16.mxu0 0
        %462 = vmatpush1.bf16.xpose.msra.mxu0 %v445
        %463 = vmatprep.subr.bf16.mxu0 0
        %464 = vmatpush2.bf16.xpose.msra.mxu0 0
        %465 = vmatprep.subr.bf16.mxu0 0
        %466 = vmatpush2.bf16.xpose.msra.mxu0 0
        %467 = vmatprep.subr.bf16.mxu0 0
        %468 = vmatpush2.bf16.xpose.msra.mxu0 0
        %469 = vmatprep.subr.bf16.mxu0 0
        %470 = vmatpush2.bf16.xpose.msra.mxu0 0
        %471 = vmatprep.subr.bf16.mxu0 0
        %472 = vmatpush2.bf16.xpose.msra.mxu0 0
        %473 = vmatprep.subr.bf16.mxu0 0
        %474 = vmatpush2.bf16.xpose.msra.mxu0 0
        %475 = vmatprep.subr.bf16.mxu0 0
        %476 = vmatpush2.bf16.xpose.msra.mxu0 0
        %477 = vmatprep.subr.bf16.mxu0 0
        %478 = vmatpush2.bf16.xpose.msra.mxu0 0
        %479 = vmatprep.mubr.bf16.mxu0 0
        %480 = vmatmul.mubr.bf16.gmra.mxu0 %v442
        %v481 = vpop.f32.mrf.mxu0
        %v482 = vadd.f32 0.0, %v481
        %v483 = vpop.f32.mrf.mxu0
        %v484 = vpop.f32.mrf.mxu0
        %v485 = vpop.f32.mrf.mxu0
        %486 = vdwg.mxu0
        %487 = vrot.lane.b32.xlu0 %v387, 64
        %v488 = vpop.permute.xlu0 %487
        %v490 = vsel %vm392, %v387, 0
        %v493 = vsel %vm392, %v488, 0
        %495 = vmatprep.subr.bf16.mxu0 0
        %496 = vmatpush1.bf16.xpose.msra.mxu0 0
        %497 = vmatprep.subr.bf16.mxu0 0
        %498 = vmatpush1.bf16.xpose.msra.mxu0 0
        %499 = vmatprep.subr.bf16.mxu0 0
        %500 = vmatpush1.bf16.xpose.msra.mxu0 0
        %501 = vmatprep.subr.bf16.mxu0 0
        %502 = vmatpush1.bf16.xpose.msra.mxu0 0
        %503 = vmatprep.subr.bf16.mxu0 0
        %504 = vmatpush1.bf16.xpose.msra.mxu0 0
        %505 = vmatprep.subr.bf16.mxu0 0
        %506 = vmatpush1.bf16.xpose.msra.mxu0 0
        %507 = vmatprep.subr.bf16.mxu0 0
        %508 = vmatpush1.bf16.xpose.msra.mxu0 0
        %509 = vmatprep.subr.bf16.mxu0 0
        %510 = vmatpush1.bf16.xpose.msra.mxu0 %v493
        %511 = vmatprep.subr.bf16.mxu0 0
        %512 = vmatpush2.bf16.xpose.msra.mxu0 0
        %513 = vmatprep.subr.bf16.mxu0 0
        %514 = vmatpush2.bf16.xpose.msra.mxu0 0
        %515 = vmatprep.subr.bf16.mxu0 0
        %516 = vmatpush2.bf16.xpose.msra.mxu0 0
        %517 = vmatprep.subr.bf16.mxu0 0
        %518 = vmatpush2.bf16.xpose.msra.mxu0 0
        %519 = vmatprep.subr.bf16.mxu0 0
        %520 = vmatpush2.bf16.xpose.msra.mxu0 0
        %521 = vmatprep.subr.bf16.mxu0 0
        %522 = vmatpush2.bf16.xpose.msra.mxu0 0
        %523 = vmatprep.subr.bf16.mxu0 0
        %524 = vmatpush2.bf16.xpose.msra.mxu0 0
        %525 = vmatprep.subr.bf16.mxu0 0
        %526 = vmatpush2.bf16.xpose.msra.mxu0 0
        %527 = vmatprep.mubr.bf16.mxu0 0
        %528 = vmatmul.mubr.bf16.gmra.mxu0 %v490
        %v529 = vpop.f32.mrf.mxu0
        %v530 = vadd.f32 0.0, %v529
        %v531 = vpop.f32.mrf.mxu0
        %v532 = vpop.f32.mrf.mxu0
        %v533 = vpop.f32.mrf.mxu0
        %534 = vdwg.mxu0
        %535 = vrot.lane.b32.xlu0 %v389, 64
        %v536 = vpop.permute.xlu0 %535
        %v538 = vsel %vm392, %v389, 0
        %v541 = vsel %vm392, %v536, 0
        %543 = vmatprep.subr.bf16.mxu0 0
        %544 = vmatpush1.bf16.xpose.msra.mxu0 0
        %545 = vmatprep.subr.bf16.mxu0 0
        %546 = vmatpush1.bf16.xpose.msra.mxu0 0
        %547 = vmatprep.subr.bf16.mxu0 0
        %548 = vmatpush1.bf16.xpose.msra.mxu0 0
        %549 = vmatprep.subr.bf16.mxu0 0
        %550 = vmatpush1.bf16.xpose.msra.mxu0 0
        %551 = vmatprep.subr.bf16.mxu0 0
        %552 = vmatpush1.bf16.xpose.msra.mxu0 0
        %553 = vmatprep.subr.bf16.mxu0 0
        %554 = vmatpush1.bf16.xpose.msra.mxu0 0
        %555 = vmatprep.subr.bf16.mxu0 0
        %556 = vmatpush1.bf16.xpose.msra.mxu0 0
        %557 = vmatprep.subr.bf16.mxu0 0
        %558 = vmatpush1.bf16.xpose.msra.mxu0 %v541
        %559 = vmatprep.subr.bf16.mxu0 0
        %560 = vmatpush2.bf16.xpose.msra.mxu0 0
        %561 = vmatprep.subr.bf16.mxu0 0
        %562 = vmatpush2.bf16.xpose.msra.mxu0 0
        %563 = vmatprep.subr.bf16.mxu0 0
        %564 = vmatpush2.bf16.xpose.msra.mxu0 0
        %565 = vmatprep.subr.bf16.mxu0 0
        %566 = vmatpush2.bf16.xpose.msra.mxu0 0
        %567 = vmatprep.subr.bf16.mxu0 0
        %568 = vmatpush2.bf16.xpose.msra.mxu0 0
        %569 = vmatprep.subr.bf16.mxu0 0
        %570 = vmatpush2.bf16.xpose.msra.mxu0 0
        %571 = vmatprep.subr.bf16.mxu0 0
        %572 = vmatpush2.bf16.xpose.msra.mxu0 0
        %573 = vmatprep.subr.bf16.mxu0 0
        %574 = vmatpush2.bf16.xpose.msra.mxu0 0
        %575 = vmatprep.mubr.bf16.mxu0 0
        %576 = vmatmul.mubr.bf16.gmra.mxu0 %v538
        %v577 = vpop.f32.mrf.mxu0
        %v578 = vadd.f32 0.0, %v577
        %v579 = vpop.f32.mrf.mxu0
        %v580 = vpop.f32.mrf.mxu0
        %v581 = vpop.f32.mrf.mxu0
        %582 = vdwg.mxu0
        %v583 = vld [vmem:[%s282] sm:$0x1]
        %v584 = vlaneseq
        %v585 = vshrl.u32 %v584, 7
        %v586 = vlaneseq
        %v587 = vand.u32 %v586, 127
        %vm588 = vcmp.gt.s32.totalorder %v585, %v587
        %v589 = vsel %vm588, 1, 0
        %v590 = vcvt.s32.f32 %v589
        %v591 = vsub.f32 1.0, %v583
        %v593 = vlaneseq
        %v594 = vshrl.u32 %v593, 7
        %v595 = vsub.s32 0, %v594
        %v596 = vrot.slane %v591, %v595
        %v598 = vadd.f32 %v596, %v590
        %v599 = vmul.f32 %v598, -2.5e+11
        %v601 = vlaneseq
        %v602 = vshrl.u32 %v601, 7
        %v603 = vsub.s32 0, %v602
        %v604 = vrot.slane %v583, %v603
        %v606 = vmul.f32 %v434, %v604
        %v607 = vmul.f32 %v482, %v604
        %v608 = vmul.f32 %v530, %v604
        %v609 = vmul.f32 %v578, %v604
        %v610 = vadd.f32 %v606, %v599
        %v611 = vadd.f32 %v607, %v599
        %v612 = vadd.f32 %v608, %v599
        %v613 = vadd.f32 %v609, %v599
        %vm614 = vcmask 64512
        %615 = vst.msk [vmem:[%s279] sm:$0xff] %vm614, %v610
        %616 = vst.msk [vmem:[%s279 + $0x8] sm:$0xff] %vm614, %v611
        %617 = vst.msk [vmem:[%s279 + $0x10] sm:$0xff] %vm614, %v612
        %618 = vst.msk [vmem:[%s279 + $0x18] sm:$0xff] %vm614, %v613
        %s619 = sand.u32 %s146, 1
        %s620 = scalar_lea.sflag [#allocation4], %s619
        %s621 = sand.u32 %s146, 1
        %s622 = smul.addr %s621, 32
        %s623 = scalar_lea.vmem [#allocation8], %s622
        // Predicated region
        $region53: #{tpu_custom_call.1} parent=39 // pred_check
          %p624 = pneg %p156
        $region54: #{tpu_custom_call.1} parent=39 // pred_check_branch
          %626 = sbr.rel (%p624) target = $region56
        $region55: #{tpu_custom_call.1} parent=39 // pred_region
          %s628 = ssub.s32 512, 512
          %629 = vsyncadd %s620, %s628
          %s630 = smul.addr %s23, 4
          %s631 = smul.addr %s630, 128
          %s632 = scalar_lea.hbm %s5, %s631
          %s633 = sshll.u32 %s623, 4
          %s634 = int_to_ptr.vmem [resolvable:$true] %s633
          %639 = dma.vmem_to_hbm [thread:$0]  %s634, 512, %s632, %s620, 128, 128, 8
        $region56: #{tpu_custom_call.1} parent=39 // pred_fallthru
          _
      $region40: #{tpu_custom_call.1} parent=5 // pred_fallthru
        _
      %p640 = scmp.le.s32.totalorder 2, %s18
      // Predicated region
      $region57: #{tpu_custom_call.1} parent=5 // pred_check
        %p641 = pneg %p640
      $region58: #{tpu_custom_call.1} parent=5 // pred_check_branch
        %643 = sbr.rel (%p641) target = $region60
      $region59: #{tpu_custom_call.1} parent=5 // pred_region
        %s644 = ssub.s32 %s18, 2
        // Predicated region
        $region61: #{tpu_custom_call.1} parent=59 // pred_check
          %p645 = pneg %p162
        $region62: #{tpu_custom_call.1} parent=59 // pred_check_branch
          %647 = sbr.rel (%p645) target = $region64
        $region63: #{tpu_custom_call.1} parent=59 // pred_region
          %s648 = sand.u32 %s147, 1
          %s649 = scalar_lea.sflag [#allocation4], %s648
          %s650 = sand.u32 %s147, 1
          %s651 = smul.addr %s650, 32
          %s652 = scalar_lea.vmem [#allocation8], %s651
          %653 = dma.done %s649, 512
        $region64: #{tpu_custom_call.1} parent=59 // pred_fallthru
          _
      $region60: #{tpu_custom_call.1} parent=5 // pred_fallthru
        _
    $region6: #{tpu_custom_call.1} parent=1 // loop_footer
      %s22 = sadd.s32 1, %s18
    $region7: #{tpu_custom_call.1} parent=1 // loop_footer_branch
      %17 = sbr.rel target = $region3
    $region8: #{tpu_custom_call.1} parent=1 // loop_exit
      _
    %654 = vsyncpa [#allocation3], 1
    %s655 = scalar_lea.sflag [#allocation3], 1
    %656 = vsyncpa %s655, 1
    %657 = vsyncpa [#allocation6], 1
    %658 = vsyncpa [#allocation4], 1
    %s659 = scalar_lea.sflag [#allocation4], 1
    %660 = vsyncpa %s659, 1

</llo_original>
